<compile_context>
chip_gen: v7x
topology: tpu7x:2x2x1
jax: 0.10.0
libtpu: 0.0.40
codegen_flags: <defaults>
</compile_context>

<pallas_src>
import jax
import jax.numpy as jnp
from jax import lax
from jax.experimental import pallas as pl
from jax.experimental.pallas import tpu as pltpu

IN_DIM = 28 * 28    # 784
HID = 200           # real fc1/fc2 width (softmax is over these 200 features)
HID_PAD = 256       # padded to 2x128 lanes for lane-dense MXU tiles / stores
OUT_UNUSED = 10     # fc3 exists in __init__ but is not used in forward()


def _round_up(n, m):
    return ((n + m - 1) // m) * m


def _mlp_kernel(x_ref, w1_ref, b1_ref, w2_ref, b2_ref, o_ref):
    # fc1 + relu : (TB,784)bf16 @ (784,256)bf16 -> f32 accumulation on the MXU
    h1 = jnp.dot(x_ref[...], w1_ref[...], preferred_element_type=jnp.float32)
    h1 = jnp.maximum(h1 + b1_ref[...], 0.0)
    # fc2 + relu : feed bf16 back to the MXU, keep f32 accumulation
    h2 = jnp.dot(h1.astype(jnp.bfloat16), w2_ref[...],
                 preferred_element_type=jnp.float32)
    h2 = jnp.maximum(h2 + b2_ref[...], 0.0)

    # Numerically stable softmax over the 200 real columns.
    # Padded columns of h2 are exactly 0 (zero weights/bias + relu) and softmax is
    # shift-invariant, so the row max over all 256 columns is safe.  Mask the padded
    # exponentials to 0 so they contribute nothing to the denominator.
    col = lax.broadcasted_iota(jnp.int32, (1, HID_PAD), 1)
    m = jnp.max(h2, axis=-1, keepdims=True)
    e = jnp.where(col < HID, jnp.exp(h2 - m), 0.0)
    denom = jnp.sum(e, axis=-1, keepdims=True)
    o_ref[...] = (e / denom).astype(o_ref.dtype)


def mlp_mnist_forward(x, params, *, tb=1024):
    """x: any shape reshapeable to (-1, 784). Returns (B, 200) f32 softmax probs."""
    w1, b1, w2, b2 = params["w1"], params["b1"], params["w2"], params["b2"]

    x2d = x.reshape(-1, IN_DIM)
    B = x2d.shape[0]

    # batch tile: bf16 sublane packing wants a multiple of 16 rows
    TB = min(tb, _round_up(max(B, 1), 16))
    Bp = _round_up(B, TB)
    if Bp != B:
        x2d = jnp.pad(x2d, ((0, Bp - B), (0, 0)))
    x_bf = x2d.astype(jnp.bfloat16)

    # pad 200 -> 256 lanes once (zeros keep fc1/fc2 math exact), cast weights to bf16
    w1p = jnp.pad(w1, ((0, 0), (0, HID_PAD - HID))).astype(jnp.bfloat16)
    b1p = jnp.pad(b1, ((0, 0), (0, HID_PAD - HID))).astype(jnp.float32)
    w2p = jnp.pad(w2, ((0, HID_PAD - HID), (0, HID_PAD - HID))).astype(jnp.bfloat16)
    b2p = jnp.pad(b2, ((0, 0), (0, HID_PAD - HID))).astype(jnp.float32)

    grid = (Bp // TB,)

    cost = pl.CostEstimate(
        flops=2 * Bp * (IN_DIM * HID_PAD + HID_PAD * HID_PAD),
        transcendentals=Bp * HID_PAD,
        bytes_accessed=(Bp * IN_DIM * 2            # x (bf16)
                        + IN_DIM * HID_PAD * 2     # w1 (bf16)
                        + HID_PAD * HID_PAD * 2    # w2 (bf16)
                        + 2 * HID_PAD * 4          # biases (f32)
                        + Bp * HID_PAD * 4),       # out (f32)
    )

    out = pl.pallas_call(
        _mlp_kernel,
        out_shape=jax.ShapeDtypeStruct((Bp, HID_PAD), jnp.float32),
        grid=grid,
        in_specs=[
            pl.BlockSpec((TB, IN_DIM), lambda i: (i, 0)),       # batch-tiled activations
            pl.BlockSpec((IN_DIM, HID_PAD), lambda i: (0, 0)),  # weights: VMEM-resident
            pl.BlockSpec((1, HID_PAD), lambda i: (0, 0)),
            pl.BlockSpec((HID_PAD, HID_PAD), lambda i: (0, 0)),
            pl.BlockSpec((1, HID_PAD), lambda i: (0, 0)),
        ],
        out_specs=pl.BlockSpec((TB, HID_PAD), lambda i: (i, 0)),
        compiler_params=pltpu.CompilerParams(
            dimension_semantics=("parallel",)),
        cost_estimate=cost,
    )(x_bf, w1p, b1p, w2p, b2p)

    # drop batch padding and the 56 padded (zero-probability) softmax columns
    return out[:B, :HID]


def init_params(key):
    """Deterministic init matching PyTorch nn.Linear default:
    U(-1/sqrt(fan_in), 1/sqrt(fan_in)) for both weight and bias."""
    k1, k2, k3, k4, k5, k6 = jax.random.split(key, 6)

    def lin(kw, kb, fan_in, fan_out):
        bound = 1.0 / jnp.sqrt(fan_in)
        w = jax.random.uniform(kw, (fan_in, fan_out), jnp.float32, -bound, bound)
        b = jax.random.uniform(kb, (1, fan_out), jnp.float32, -bound, bound)
        return w, b

    w1, b1 = lin(k1, k2, IN_DIM, HID)
    w2, b2 = lin(k3, k4, HID, HID)
    # fc3 is initialized for parity with __init__ but unused in forward().
    w3, b3 = lin(k5, k6, HID, OUT_UNUSED)
    return {"w1": w1, "b1": b1, "w2": w2, "b2": b2, "w3": w3, "b3": b3}


if __name__ == "__main__":
    key = jax.random.PRNGKey(0)
    kp, kx = jax.random.split(key)
    params = init_params(kp)

    # MNIST-like input: NCHW (B, 1, 28, 28), small batch.
    x = jax.random.normal(kx, (8, 1, 28, 28), dtype=jnp.float32)

    fwd = jax.jit(mlp_mnist_forward)
    out = jax.block_until_ready(fwd(x, params))

    # sanity: shape (8, 200), rows sum to 1 (exact division -> tight tolerance)
    assert out.shape == (8, HID)
    assert jnp.allclose(jnp.sum(out, axis=1), 1.0, atol=1e-4)

    # Reference matching the kernel's bf16 MXU path: quantize inputs/weights/hidden
    # activations to bf16, accumulate in f32 (same as preferred_element_type=f32).
    def q(a):
        return a.astype(jnp.bfloat16).astype(jnp.float32)

    x2d = q(x.reshape(-1, IN_DIM))
    h = jnp.maximum(x2d @ q(params["w1"]) + params["b1"], 0.0)
    h = jnp.maximum(q(h) @ q(params["w2"]) + params["b2"], 0.0)
    ref = jax.nn.softmax(h, axis=1)
    assert jnp.allclose(out, ref, atol=2e-3)

    print("KERNEL_OK")
</pallas_src>

<mosaic_0001>
module attributes {stable_mosaic.version = 11 : i64} {
  func.func @_mlp_kernel(%arg0: i32, %arg1: memref<16x784xbf16, #tpu.memory_space<vmem>>, %arg2: memref<784x256xbf16, #tpu.memory_space<vmem>>, %arg3: memref<1x256xf32, #tpu.memory_space<vmem>>, %arg4: memref<256x256xbf16, #tpu.memory_space<vmem>>, %arg5: memref<1x256xf32, #tpu.memory_space<vmem>>, %arg6: memref<16x256xf32, #tpu.memory_space<vmem>>) attributes {dimension_semantics = [#tpu.dimension_semantics<parallel>], iteration_bounds = array<i64: 1>, scalar_prefetch = 0 : i64, scratch_operands = 0 : i64, tpu.core_type = #tpu.core_type<tc>, window_params = [{transform_indices = @transform_0, window_bounds = array<i64: 16, 784>}, {pipeline_mode = #tpu.pipeline_mode<synchronous>, transform_indices = @transform_1, window_bounds = array<i64: 784, 256>}, {pipeline_mode = #tpu.pipeline_mode<synchronous>, transform_indices = @transform_2, window_bounds = array<i64: 1, 256>}, {pipeline_mode = #tpu.pipeline_mode<synchronous>, transform_indices = @transform_3, window_bounds = array<i64: 256, 256>}, {pipeline_mode = #tpu.pipeline_mode<synchronous>, transform_indices = @transform_4, window_bounds = array<i64: 1, 256>}, {transform_indices = @transform_5, window_bounds = array<i64: 16, 256>}]} {
    %c0 = arith.constant 0 : index
    %c0_0 = arith.constant 0 : index
    %0 = vector.load %arg1[%c0, %c0_0] : memref<16x784xbf16, #tpu.memory_space<vmem>>, vector<16x784xbf16>
    %c0_1 = arith.constant 0 : index
    %c0_2 = arith.constant 0 : index
    %1 = vector.load %arg2[%c0_1, %c0_2] : memref<784x256xbf16, #tpu.memory_space<vmem>>, vector<784x256xbf16>
    %cst = arith.constant dense<0.000000e+00> : vector<16x256xf32>
    %2 = tpu.matmul %0, %1, %cst {dimension_numbers = #tpu.dot_dimension_numbers<[1], [0], [0], [1], [0, 0, 1, 1], [], []>} : vector<16x784xbf16>, vector<784x256xbf16>, vector<16x256xf32> -> vector<16x256xf32>
    %c0_3 = arith.constant 0 : index
    %c0_4 = arith.constant 0 : index
    %3 = vector.load %arg3[%c0_3, %c0_4] : memref<1x256xf32, #tpu.memory_space<vmem>>, vector<1x256xf32>
    %4 = vector.broadcast %3 : vector<1x256xf32> to vector<16x256xf32>
    %5 = arith.addf %2, %4 : vector<16x256xf32>
    %cst_5 = arith.constant 0.000000e+00 : f32
    %6 = vector.broadcast %cst_5 : f32 to vector<16x256xf32>
    %7 = arith.maximumf %5, %6 : vector<16x256xf32>
    %8 = arith.truncf %7 : vector<16x256xf32> to vector<16x256xbf16>
    %c0_6 = arith.constant 0 : index
    %c0_7 = arith.constant 0 : index
    %9 = vector.load %arg4[%c0_6, %c0_7] : memref<256x256xbf16, #tpu.memory_space<vmem>>, vector<256x256xbf16>
    %cst_8 = arith.constant dense<0.000000e+00> : vector<16x256xf32>
    %10 = tpu.matmul %8, %9, %cst_8 {dimension_numbers = #tpu.dot_dimension_numbers<[1], [0], [0], [1], [0, 0, 1, 1], [], []>} : vector<16x256xbf16>, vector<256x256xbf16>, vector<16x256xf32> -> vector<16x256xf32>
    %c0_9 = arith.constant 0 : index
    %c0_10 = arith.constant 0 : index
    %11 = vector.load %arg5[%c0_9, %c0_10] : memref<1x256xf32, #tpu.memory_space<vmem>>, vector<1x256xf32>
    %12 = vector.broadcast %11 : vector<1x256xf32> to vector<16x256xf32>
    %13 = arith.addf %10, %12 : vector<16x256xf32>
    %cst_11 = arith.constant 0.000000e+00 : f32
    %14 = vector.broadcast %cst_11 : f32 to vector<16x256xf32>
    %15 = arith.maximumf %13, %14 : vector<16x256xf32>
    %16 = tpu.iota {dimensions = array<i32: 1>} : vector<1x256xi32>
    %cst_12 = arith.constant dense<0xFF800000> : vector<16xf32>
    %17 = vector.multi_reduction <maximumf>, %15, %cst_12 [1] : vector<16x256xf32> to vector<16xf32>
    %18 = vector.shape_cast %17 : vector<16xf32> to vector<16x1xf32>
    %c200_i32 = arith.constant 200 : i32
    %19 = vector.broadcast %c200_i32 : i32 to vector<1x256xi32>
    %20 = arith.cmpi slt, %16, %19 : vector<1x256xi32>
    %21 = vector.broadcast %18 : vector<16x1xf32> to vector<16x256xf32>
    %22 = arith.subf %15, %21 : vector<16x256xf32>
    %23 = math.exp %22 : vector<16x256xf32>
    %cst_13 = arith.constant 0.000000e+00 : f32
    %24 = vector.shape_cast %20 : vector<1x256xi1> to vector<1x256xi1>
    %25 = vector.broadcast %24 : vector<1x256xi1> to vector<16x256xi1>
    %26 = vector.broadcast %cst_13 : f32 to vector<16x256xf32>
    %27 = arith.select %25, %23, %26 : vector<16x256xi1>, vector<16x256xf32>
    %cst_14 = arith.constant dense<0.000000e+00> : vector<16xf32>
    %28 = vector.multi_reduction <add>, %27, %cst_14 [1] : vector<16x256xf32> to vector<16xf32>
    %29 = vector.shape_cast %28 : vector<16xf32> to vector<16x1xf32>
    %30 = vector.broadcast %29 : vector<16x1xf32> to vector<16x256xf32>
    %31 = arith.divf %27, %30 : vector<16x256xf32>
    %c0_15 = arith.constant 0 : index
    %c0_16 = arith.constant 0 : index
    %32 = vector.load %arg6[%c0_15, %c0_16] : memref<16x256xf32, #tpu.memory_space<vmem>>, vector<16x256xf32>
    tpu.vector_store %arg6[%c0_15, %c0_16], %31 {strides = array<i32>} : memref<16x256xf32, #tpu.memory_space<vmem>>, vector<16x256xf32>,
    return
  }
  func.func @transform_0(%arg0: i32) -> (i32, i32) {
    %c0_i32 = arith.constant 0 : i32
    %c0_i32_0 = arith.constant 0 : i32
    return %arg0, %c0_i32 : i32, i32
  }
  func.func @transform_1(%arg0: i32) -> (i32, i32) {
    %c0_i32 = arith.constant 0 : i32
    %c0_i32_0 = arith.constant 0 : i32
    %c0_i32_1 = arith.constant 0 : i32
    return %c0_i32, %c0_i32_0 : i32, i32
  }
  func.func @transform_2(%arg0: i32) -> (i32, i32) {
    %c0_i32 = arith.constant 0 : i32
    %c0_i32_0 = arith.constant 0 : i32
    %c0_i32_1 = arith.constant 0 : i32
    return %c0_i32, %c0_i32_0 : i32, i32
  }
  func.func @transform_3(%arg0: i32) -> (i32, i32) {
    %c0_i32 = arith.constant 0 : i32
    %c0_i32_0 = arith.constant 0 : i32
    %c0_i32_1 = arith.constant 0 : i32
    return %c0_i32, %c0_i32_0 : i32, i32
  }
  func.func @transform_4(%arg0: i32) -> (i32, i32) {
    %c0_i32 = arith.constant 0 : i32
    %c0_i32_0 = arith.constant 0 : i32
    %c0_i32_1 = arith.constant 0 : i32
    return %c0_i32, %c0_i32_0 : i32, i32
  }
  func.func @transform_5(%arg0: i32) -> (i32, i32) {
    %c0_i32 = arith.constant 0 : i32
    %c0_i32_0 = arith.constant 0 : i32
    return %arg0, %c0_i32 : i32, i32
  }
}

</mosaic_0001>

<llo_original>
// kernel: mlp_mnist_forward.1
$region0: #{mlp_mnist_forward.1}
  #allocation0 [shape = 'u32[]', space=smem, size = 0x4, offset = 0x4, fixed_abs, tag = 'smem constant byte address 0x4 - core index']
  #allocation1 [shape = 'u32[144,128]{1,0:T(1,128)}', space=vmem, size = 0x12000, scoped, tag = 'internal scratch']
  %s0 = inlined_call_operand.vmem [shape: bf16[16,784], index: 0, kind: input, shape index: {}]
  %s1 = inlined_call_operand.vmem [shape: bf16[784,256], index: 1, kind: input, shape index: {}]
  %s2 = inlined_call_operand.vmem [shape: f32[1,256], index: 2, kind: input, shape index: {}]
  %s3 = inlined_call_operand.vmem [shape: bf16[256,256], index: 3, kind: input, shape index: {}]
  %s4 = inlined_call_operand.vmem [shape: f32[1,256], index: 4, kind: input, shape index: {}]
  %s5 = inlined_call_operand.vmem [shape: f32[16,256], index: 5, kind: output, shape index: {}]
  %s6 = sld [smem:[#allocation0]]
  $region30: #{mlp_mnist_forward.1} parent=0
    _
  %s8 = ssub.s32 1, %s6
  %s9 = scalar_select 0, %s8, %s6
  // Predicated region
  $region2: #{mlp_mnist_forward.1} parent=0 // pred_check
    _
  $region3: #{mlp_mnist_forward.1} parent=0 // pred_check_branch
    %11 = sbr.rel (0) target = $region5
  $region4: #{mlp_mnist_forward.1} parent=0 // pred_region
    _
  $region5: #{mlp_mnist_forward.1} parent=0 // pred_fallthru
    _
  // Predicated region
  $region6: #{mlp_mnist_forward.1} parent=0 // pred_check
    _
  $region7: #{mlp_mnist_forward.1} parent=0 // pred_check_branch
    %13 = sbr.rel (0) target = $region9
  $region8: #{mlp_mnist_forward.1} parent=0 // pred_region
    _
  $region9: #{mlp_mnist_forward.1} parent=0 // pred_fallthru
    _
  // Predicated region
  $region10: #{mlp_mnist_forward.1} parent=0 // pred_check
    _
  $region11: #{mlp_mnist_forward.1} parent=0 // pred_check_branch
    %15 = sbr.rel (0) target = $region13
  $region12: #{mlp_mnist_forward.1} parent=0 // pred_region
    _
  $region13: #{mlp_mnist_forward.1} parent=0 // pred_fallthru
    _
  // Predicated region
  $region14: #{mlp_mnist_forward.1} parent=0 // pred_check
    _
  $region15: #{mlp_mnist_forward.1} parent=0 // pred_check_branch
    %17 = sbr.rel (0) target = $region17
  $region16: #{mlp_mnist_forward.1} parent=0 // pred_region
    _
  $region17: #{mlp_mnist_forward.1} parent=0 // pred_fallthru
    _
  // Predicated region
  $region18: #{mlp_mnist_forward.1} parent=0 // pred_check
    _
  $region19: #{mlp_mnist_forward.1} parent=0 // pred_check_branch
    %19 = sbr.rel (0) target = $region21
  $region20: #{mlp_mnist_forward.1} parent=0 // pred_region
    _
  $region21: #{mlp_mnist_forward.1} parent=0 // pred_fallthru
    _
  %v21 = vld [vmem:[%s0] sm:$0xff]
  %v22 = vld [vmem:[%s0 + $0x8] sm:$0xff]
  %v23 = vld [vmem:[%s0 + $0x10] sm:$0xff]
  %v24 = vld [vmem:[%s0 + $0x18] sm:$0xf]
  %v25 = vld [vmem:[%s0 + $0x1c] sm:$0xff]
  %v26 = vld [vmem:[%s0 + $0x24] sm:$0xff]
  %v27 = vld [vmem:[%s0 + $0x2c] sm:$0xff]
  %v28 = vld [vmem:[%s0 + $0x34] sm:$0xf]
  %v29 = vld [vmem:[%s1] sm:$0xff]
  %v30 = vld [vmem:[%s1 + $0x8] sm:$0xff]
  %v31 = vld [vmem:[%s1 + $0x10] sm:$0xff]
  %v32 = vld [vmem:[%s1 + $0x18] sm:$0xff]
  %v33 = vld [vmem:[%s1 + $0x20] sm:$0xff]
  %v34 = vld [vmem:[%s1 + $0x28] sm:$0xff]
  %v35 = vld [vmem:[%s1 + $0x30] sm:$0xff]
  %v36 = vld [vmem:[%s1 + $0x38] sm:$0xff]
  %v37 = vld [vmem:[%s1 + $0x40] sm:$0xff]
  %v38 = vld [vmem:[%s1 + $0x48] sm:$0xff]
  %v39 = vld [vmem:[%s1 + $0x50] sm:$0xff]
  %v40 = vld [vmem:[%s1 + $0x58] sm:$0xff]
  %v41 = vld [vmem:[%s1 + $0x60] sm:$0xff]
  %v42 = vld [vmem:[%s1 + $0x68] sm:$0xff]
  %v43 = vld [vmem:[%s1 + $0x70] sm:$0xff]
  %v44 = vld [vmem:[%s1 + $0x78] sm:$0xff]
  %v45 = vld [vmem:[%s1 + $0x80] sm:$0xff]
  %v46 = vld [vmem:[%s1 + $0x88] sm:$0xff]
  %v47 = vld [vmem:[%s1 + $0x90] sm:$0xff]
  %v48 = vld [vmem:[%s1 + $0x98] sm:$0xff]
  %v49 = vld [vmem:[%s1 + $0xa0] sm:$0xff]
  %v50 = vld [vmem:[%s1 + $0xa8] sm:$0xff]
  %v51 = vld [vmem:[%s1 + $0xb0] sm:$0xff]
  %v52 = vld [vmem:[%s1 + $0xb8] sm:$0xff]
  %v53 = vld [vmem:[%s1 + $0xc0] sm:$0xff]
  %v54 = vld [vmem:[%s1 + $0xc8] sm:$0xff]
  %v55 = vld [vmem:[%s1 + $0xd0] sm:$0xff]
  %v56 = vld [vmem:[%s1 + $0xd8] sm:$0xff]
  %v57 = vld [vmem:[%s1 + $0xe0] sm:$0xff]
  %v58 = vld [vmem:[%s1 + $0xe8] sm:$0xff]
  %v59 = vld [vmem:[%s1 + $0xf0] sm:$0xff]
  %v60 = vld [vmem:[%s1 + $0xf8] sm:$0xff]
  %v61 = vld [vmem:[%s1 + $0x100] sm:$0xff]
  %v62 = vld [vmem:[%s1 + $0x108] sm:$0xff]
  %v63 = vld [vmem:[%s1 + $0x110] sm:$0xff]
  %v64 = vld [vmem:[%s1 + $0x118] sm:$0xff]
  %v65 = vld [vmem:[%s1 + $0x120] sm:$0xff]
  %v66 = vld [vmem:[%s1 + $0x128] sm:$0xff]
  %v67 = vld [vmem:[%s1 + $0x130] sm:$0xff]
  %v68 = vld [vmem:[%s1 + $0x138] sm:$0xff]
  %v69 = vld [vmem:[%s1 + $0x140] sm:$0xff]
  %v70 = vld [vmem:[%s1 + $0x148] sm:$0xff]
  %v71 = vld [vmem:[%s1 + $0x150] sm:$0xff]
  %v72 = vld [vmem:[%s1 + $0x158] sm:$0xff]
  %v73 = vld [vmem:[%s1 + $0x160] sm:$0xff]
  %v74 = vld [vmem:[%s1 + $0x168] sm:$0xff]
  %v75 = vld [vmem:[%s1 + $0x170] sm:$0xff]
  %v76 = vld [vmem:[%s1 + $0x178] sm:$0xff]
  %v77 = vld [vmem:[%s1 + $0x180] sm:$0xff]
  %v78 = vld [vmem:[%s1 + $0x188] sm:$0xff]
  %v79 = vld [vmem:[%s1 + $0x190] sm:$0xff]
  %v80 = vld [vmem:[%s1 + $0x198] sm:$0xff]
  %v81 = vld [vmem:[%s1 + $0x1a0] sm:$0xff]
  %v82 = vld [vmem:[%s1 + $0x1a8] sm:$0xff]
  %v83 = vld [vmem:[%s1 + $0x1b0] sm:$0xff]
  %v84 = vld [vmem:[%s1 + $0x1b8] sm:$0xff]
  %v85 = vld [vmem:[%s1 + $0x1c0] sm:$0xff]
  %v86 = vld [vmem:[%s1 + $0x1c8] sm:$0xff]
  %v87 = vld [vmem:[%s1 + $0x1d0] sm:$0xff]
  %v88 = vld [vmem:[%s1 + $0x1d8] sm:$0xff]
  %v89 = vld [vmem:[%s1 + $0x1e0] sm:$0xff]
  %v90 = vld [vmem:[%s1 + $0x1e8] sm:$0xff]
  %v91 = vld [vmem:[%s1 + $0x1f0] sm:$0xff]
  %v92 = vld [vmem:[%s1 + $0x1f8] sm:$0xff]
  %v93 = vld [vmem:[%s1 + $0x200] sm:$0xff]
  %v94 = vld [vmem:[%s1 + $0x208] sm:$0xff]
  %v95 = vld [vmem:[%s1 + $0x210] sm:$0xff]
  %v96 = vld [vmem:[%s1 + $0x218] sm:$0xff]
  %v97 = vld [vmem:[%s1 + $0x220] sm:$0xff]
  %v98 = vld [vmem:[%s1 + $0x228] sm:$0xff]
  %v99 = vld [vmem:[%s1 + $0x230] sm:$0xff]
  %v100 = vld [vmem:[%s1 + $0x238] sm:$0xff]
  %v101 = vld [vmem:[%s1 + $0x240] sm:$0xff]
  %v102 = vld [vmem:[%s1 + $0x248] sm:$0xff]
  %v103 = vld [vmem:[%s1 + $0x250] sm:$0xff]
  %v104 = vld [vmem:[%s1 + $0x258] sm:$0xff]
  %v105 = vld [vmem:[%s1 + $0x260] sm:$0xff]
  %v106 = vld [vmem:[%s1 + $0x268] sm:$0xff]
  %v107 = vld [vmem:[%s1 + $0x270] sm:$0xff]
  %v108 = vld [vmem:[%s1 + $0x278] sm:$0xff]
  %v109 = vld [vmem:[%s1 + $0x280] sm:$0xff]
  %v110 = vld [vmem:[%s1 + $0x288] sm:$0xff]
  %v111 = vld [vmem:[%s1 + $0x290] sm:$0xff]
  %v112 = vld [vmem:[%s1 + $0x298] sm:$0xff]
  %v113 = vld [vmem:[%s1 + $0x2a0] sm:$0xff]
  %v114 = vld [vmem:[%s1 + $0x2a8] sm:$0xff]
  %v115 = vld [vmem:[%s1 + $0x2b0] sm:$0xff]
  %v116 = vld [vmem:[%s1 + $0x2b8] sm:$0xff]
  %v117 = vld [vmem:[%s1 + $0x2c0] sm:$0xff]
  %v118 = vld [vmem:[%s1 + $0x2c8] sm:$0xff]
  %v119 = vld [vmem:[%s1 + $0x2d0] sm:$0xff]
  %v120 = vld [vmem:[%s1 + $0x2d8] sm:$0xff]
  %v121 = vld [vmem:[%s1 + $0x2e0] sm:$0xff]
  %v122 = vld [vmem:[%s1 + $0x2e8] sm:$0xff]
  %v123 = vld [vmem:[%s1 + $0x2f0] sm:$0xff]
  %v124 = vld [vmem:[%s1 + $0x2f8] sm:$0xff]
  %v125 = vld [vmem:[%s1 + $0x300] sm:$0xff]
  %v126 = vld [vmem:[%s1 + $0x308] sm:$0xff]
  %v127 = vld [vmem:[%s2] sm:$0x3]
  %v129 = vlaneseq
  %v130 = vshrl.u32 %v129, 7
  %v131 = vsub.s32 0, %v130
  %v132 = vrot.slane %v127, %v131
  %v133 = vlaneseq
  %v134 = vshrl.u32 %v133, 7
  %v135 = vsub.s32 1, %v134
  %v136 = vrot.slane %v127, %v135
  %v147 = vunpack.c.l.b16 %v21
  %v148 = vunpack.c.h.b16 %v21
  %v149 = vunpack.c.l.b16 %v22
  %v150 = vunpack.c.h.b16 %v22
  %v151 = vunpack.c.l.b16 %v23
  %v152 = vunpack.c.h.b16 %v23
  %v153 = vunpack.c.l.b16 %v24
  %v154 = vunpack.c.l.b16 %v25
  %v155 = vunpack.c.h.b16 %v25
  %v156 = vunpack.c.l.b16 %v26
  %v157 = vunpack.c.h.b16 %v26
  %v158 = vunpack.c.l.b16 %v27
  %v159 = vunpack.c.h.b16 %v27
  %v160 = vunpack.c.l.b16 %v28
  %v161 = vpack.c.b16 %v154, %v147
  %v162 = vpack.c.b16 %v155, %v148
  %v163 = vpack.c.b16 %v156, %v149
  %v164 = vpack.c.b16 %v157, %v150
  %v165 = vpack.c.b16 %v158, %v151
  %v166 = vpack.c.b16 %v159, %v152
  %v167 = vpack.c.b16 %v160, %v153
  %v272 = vunpack.c.l.b16 %v29
  %v273 = vunpack.c.h.b16 %v29
  %v274 = vunpack.c.l.b16 %v30
  %v275 = vunpack.c.h.b16 %v30
  %v276 = vunpack.c.l.b16 %v31
  %v277 = vunpack.c.h.b16 %v31
  %v278 = vunpack.c.l.b16 %v32
  %v279 = vunpack.c.h.b16 %v32
  %v280 = vunpack.c.l.b16 %v33
  %v281 = vunpack.c.h.b16 %v33
  %v282 = vunpack.c.l.b16 %v34
  %v283 = vunpack.c.h.b16 %v34
  %v284 = vunpack.c.l.b16 %v35
  %v285 = vunpack.c.h.b16 %v35
  %v286 = vunpack.c.l.b16 %v36
  %v287 = vunpack.c.h.b16 %v36
  %v288 = vunpack.c.l.b16 %v37
  %v289 = vunpack.c.h.b16 %v37
  %v290 = vunpack.c.l.b16 %v38
  %v291 = vunpack.c.h.b16 %v38
  %v292 = vunpack.c.l.b16 %v39
  %v293 = vunpack.c.h.b16 %v39
  %v294 = vunpack.c.l.b16 %v40
  %v295 = vunpack.c.h.b16 %v40
  %v296 = vunpack.c.l.b16 %v41
  %v297 = vunpack.c.h.b16 %v41
  %v298 = vunpack.c.l.b16 %v42
  %v299 = vunpack.c.h.b16 %v42
  %v300 = vunpack.c.l.b16 %v43
  %v301 = vunpack.c.h.b16 %v43
  %v302 = vunpack.c.l.b16 %v44
  %v303 = vunpack.c.h.b16 %v44
  %v304 = vunpack.c.l.b16 %v45
  %v305 = vunpack.c.h.b16 %v45
  %v306 = vunpack.c.l.b16 %v46
  %v307 = vunpack.c.h.b16 %v46
  %v308 = vunpack.c.l.b16 %v47
  %v309 = vunpack.c.h.b16 %v47
  %v310 = vunpack.c.l.b16 %v48
  %v311 = vunpack.c.h.b16 %v48
  %v312 = vunpack.c.l.b16 %v49
  %v313 = vunpack.c.h.b16 %v49
  %v314 = vunpack.c.l.b16 %v50
  %v315 = vunpack.c.h.b16 %v50
  %v316 = vunpack.c.l.b16 %v51
  %v317 = vunpack.c.h.b16 %v51
  %v318 = vunpack.c.l.b16 %v52
  %v319 = vunpack.c.h.b16 %v52
  %v320 = vunpack.c.l.b16 %v53
  %v321 = vunpack.c.h.b16 %v53
  %v322 = vunpack.c.l.b16 %v54
  %v323 = vunpack.c.h.b16 %v54
  %v324 = vunpack.c.l.b16 %v55
  %v325 = vunpack.c.h.b16 %v55
  %v326 = vunpack.c.l.b16 %v56
  %v327 = vunpack.c.h.b16 %v56
  %v328 = vunpack.c.l.b16 %v57
  %v329 = vunpack.c.h.b16 %v57
  %v330 = vunpack.c.l.b16 %v58
  %v331 = vunpack.c.h.b16 %v58
  %v332 = vunpack.c.l.b16 %v59
  %v333 = vunpack.c.h.b16 %v59
  %v334 = vunpack.c.l.b16 %v60
  %v335 = vunpack.c.h.b16 %v60
  %v336 = vunpack.c.l.b16 %v61
  %v337 = vunpack.c.h.b16 %v61
  %v338 = vunpack.c.l.b16 %v62
  %v339 = vunpack.c.h.b16 %v62
  %v340 = vunpack.c.l.b16 %v63
  %v341 = vunpack.c.h.b16 %v63
  %v342 = vunpack.c.l.b16 %v64
  %v343 = vunpack.c.h.b16 %v64
  %v344 = vunpack.c.l.b16 %v65
  %v345 = vunpack.c.h.b16 %v65
  %v346 = vunpack.c.l.b16 %v66
  %v347 = vunpack.c.h.b16 %v66
  %v348 = vunpack.c.l.b16 %v67
  %v349 = vunpack.c.h.b16 %v67
  %v350 = vunpack.c.l.b16 %v68
  %v351 = vunpack.c.h.b16 %v68
  %v352 = vunpack.c.l.b16 %v69
  %v353 = vunpack.c.h.b16 %v69
  %v354 = vunpack.c.l.b16 %v70
  %v355 = vunpack.c.h.b16 %v70
  %v356 = vunpack.c.l.b16 %v71
  %v357 = vunpack.c.h.b16 %v71
  %v358 = vunpack.c.l.b16 %v72
  %v359 = vunpack.c.h.b16 %v72
  %v360 = vunpack.c.l.b16 %v73
  %v361 = vunpack.c.h.b16 %v73
  %v362 = vunpack.c.l.b16 %v74
  %v363 = vunpack.c.h.b16 %v74
  %v364 = vunpack.c.l.b16 %v75
  %v365 = vunpack.c.h.b16 %v75
  %v366 = vunpack.c.l.b16 %v76
  %v367 = vunpack.c.h.b16 %v76
  %v368 = vunpack.c.l.b16 %v77
  %v369 = vunpack.c.h.b16 %v77
  %v370 = vunpack.c.l.b16 %v78
  %v371 = vunpack.c.h.b16 %v78
  %v372 = vunpack.c.l.b16 %v79
  %v373 = vunpack.c.h.b16 %v79
  %v374 = vunpack.c.l.b16 %v80
  %v375 = vunpack.c.h.b16 %v80
  %v376 = vunpack.c.l.b16 %v81
  %v377 = vunpack.c.h.b16 %v81
  %v378 = vunpack.c.l.b16 %v82
  %v379 = vunpack.c.h.b16 %v82
  %v380 = vunpack.c.l.b16 %v83
  %v381 = vunpack.c.h.b16 %v83
  %v382 = vunpack.c.l.b16 %v84
  %v383 = vunpack.c.h.b16 %v84
  %v384 = vunpack.c.l.b16 %v85
  %v385 = vunpack.c.h.b16 %v85
  %v386 = vunpack.c.l.b16 %v86
  %v387 = vunpack.c.h.b16 %v86
  %v388 = vunpack.c.l.b16 %v87
  %v389 = vunpack.c.h.b16 %v87
  %v390 = vunpack.c.l.b16 %v88
  %v391 = vunpack.c.h.b16 %v88
  %v392 = vunpack.c.l.b16 %v89
  %v393 = vunpack.c.h.b16 %v89
  %v394 = vunpack.c.l.b16 %v90
  %v395 = vunpack.c.h.b16 %v90
  %v396 = vunpack.c.l.b16 %v91
  %v397 = vunpack.c.h.b16 %v91
  %v398 = vunpack.c.l.b16 %v92
  %v399 = vunpack.c.h.b16 %v92
  %v400 = vunpack.c.l.b16 %v93
  %v401 = vunpack.c.h.b16 %v93
  %v402 = vunpack.c.l.b16 %v94
  %v403 = vunpack.c.h.b16 %v94
  %v404 = vunpack.c.l.b16 %v95
  %v405 = vunpack.c.h.b16 %v95
  %v406 = vunpack.c.l.b16 %v96
  %v407 = vunpack.c.h.b16 %v96
  %v408 = vunpack.c.l.b16 %v97
  %v409 = vunpack.c.h.b16 %v97
  %v410 = vunpack.c.l.b16 %v98
  %v411 = vunpack.c.h.b16 %v98
  %v412 = vunpack.c.l.b16 %v99
  %v413 = vunpack.c.h.b16 %v99
  %v414 = vunpack.c.l.b16 %v100
  %v415 = vunpack.c.h.b16 %v100
  %v416 = vunpack.c.l.b16 %v101
  %v417 = vunpack.c.h.b16 %v101
  %v418 = vunpack.c.l.b16 %v102
  %v419 = vunpack.c.h.b16 %v102
  %v420 = vunpack.c.l.b16 %v103
  %v421 = vunpack.c.h.b16 %v103
  %v422 = vunpack.c.l.b16 %v104
  %v423 = vunpack.c.h.b16 %v104
  %v424 = vunpack.c.l.b16 %v105
  %v425 = vunpack.c.h.b16 %v105
  %v426 = vunpack.c.l.b16 %v106
  %v427 = vunpack.c.h.b16 %v106
  %v428 = vunpack.c.l.b16 %v107
  %v429 = vunpack.c.h.b16 %v107
  %v430 = vunpack.c.l.b16 %v108
  %v431 = vunpack.c.h.b16 %v108
  %v432 = vunpack.c.l.b16 %v109
  %v433 = vunpack.c.h.b16 %v109
  %v434 = vunpack.c.l.b16 %v110
  %v435 = vunpack.c.h.b16 %v110
  %v436 = vunpack.c.l.b16 %v111
  %v437 = vunpack.c.h.b16 %v111
  %v438 = vunpack.c.l.b16 %v112
  %v439 = vunpack.c.h.b16 %v112
  %v440 = vunpack.c.l.b16 %v113
  %v441 = vunpack.c.h.b16 %v113
  %v442 = vunpack.c.l.b16 %v114
  %v443 = vunpack.c.h.b16 %v114
  %v444 = vunpack.c.l.b16 %v115
  %v445 = vunpack.c.h.b16 %v115
  %v446 = vunpack.c.l.b16 %v116
  %v447 = vunpack.c.h.b16 %v116
  %v448 = vunpack.c.l.b16 %v117
  %v449 = vunpack.c.h.b16 %v117
  %v450 = vunpack.c.l.b16 %v118
  %v451 = vunpack.c.h.b16 %v118
  %v452 = vunpack.c.l.b16 %v119
  %v453 = vunpack.c.h.b16 %v119
  %v454 = vunpack.c.l.b16 %v120
  %v455 = vunpack.c.h.b16 %v120
  %v456 = vunpack.c.l.b16 %v121
  %v457 = vunpack.c.h.b16 %v121
  %v458 = vunpack.c.l.b16 %v122
  %v459 = vunpack.c.h.b16 %v122
  %v460 = vunpack.c.l.b16 %v123
  %v461 = vunpack.c.h.b16 %v123
  %v462 = vunpack.c.l.b16 %v124
  %v463 = vunpack.c.h.b16 %v124
  %v464 = vunpack.c.l.b16 %v125
  %v465 = vunpack.c.h.b16 %v125
  %v466 = vunpack.c.l.b16 %v126
  %v467 = vunpack.c.h.b16 %v126
  %v468 = vpack.c.b16 %v274, %v272
  %v469 = vpack.c.b16 %v275, %v273
  %v470 = vpack.c.b16 %v278, %v276
  %v471 = vpack.c.b16 %v279, %v277
  %v472 = vpack.c.b16 %v282, %v280
  %v473 = vpack.c.b16 %v283, %v281
  %v474 = vpack.c.b16 %v286, %v284
  %v475 = vpack.c.b16 %v287, %v285
  %v476 = vpack.c.b16 %v290, %v288
  %v477 = vpack.c.b16 %v291, %v289
  %v478 = vpack.c.b16 %v294, %v292
  %v479 = vpack.c.b16 %v295, %v293
  %v480 = vpack.c.b16 %v298, %v296
  %v481 = vpack.c.b16 %v299, %v297
  %v482 = vpack.c.b16 %v302, %v300
  %v483 = vpack.c.b16 %v303, %v301
  %v484 = vpack.c.b16 %v306, %v304
  %v485 = vpack.c.b16 %v307, %v305
  %v486 = vpack.c.b16 %v310, %v308
  %v487 = vpack.c.b16 %v311, %v309
  %v488 = vpack.c.b16 %v314, %v312
  %v489 = vpack.c.b16 %v315, %v313
  %v490 = vpack.c.b16 %v318, %v316
  %v491 = vpack.c.b16 %v319, %v317
  %v492 = vpack.c.b16 %v322, %v320
  %v493 = vpack.c.b16 %v323, %v321
  %v494 = vpack.c.b16 %v326, %v324
  %v495 = vpack.c.b16 %v327, %v325
  %v496 = vpack.c.b16 %v330, %v328
  %v497 = vpack.c.b16 %v331, %v329
  %v498 = vpack.c.b16 %v334, %v332
  %v499 = vpack.c.b16 %v335, %v333
  %v500 = vpack.c.b16 %v338, %v336
  %v501 = vpack.c.b16 %v339, %v337
  %v502 = vpack.c.b16 %v342, %v340
  %v503 = vpack.c.b16 %v343, %v341
  %v504 = vpack.c.b16 %v346, %v344
  %v505 = vpack.c.b16 %v347, %v345
  %v506 = vpack.c.b16 %v350, %v348
  %v507 = vpack.c.b16 %v351, %v349
  %v508 = vpack.c.b16 %v354, %v352
  %v509 = vpack.c.b16 %v355, %v353
  %v510 = vpack.c.b16 %v358, %v356
  %v511 = vpack.c.b16 %v359, %v357
  %v512 = vpack.c.b16 %v362, %v360
  %v513 = vpack.c.b16 %v363, %v361
  %v514 = vpack.c.b16 %v366, %v364
  %v515 = vpack.c.b16 %v367, %v365
  %v516 = vpack.c.b16 %v370, %v368
  %v517 = vpack.c.b16 %v371, %v369
  %v518 = vpack.c.b16 %v374, %v372
  %v519 = vpack.c.b16 %v375, %v373
  %v520 = vpack.c.b16 %v378, %v376
  %v521 = vpack.c.b16 %v379, %v377
  %v522 = vpack.c.b16 %v382, %v380
  %v523 = vpack.c.b16 %v383, %v381
  %v524 = vpack.c.b16 %v386, %v384
  %v525 = vpack.c.b16 %v387, %v385
  %v526 = vpack.c.b16 %v390, %v388
  %v527 = vpack.c.b16 %v391, %v389
  %v528 = vpack.c.b16 %v394, %v392
  %v529 = vpack.c.b16 %v395, %v393
  %v530 = vpack.c.b16 %v398, %v396
  %v531 = vpack.c.b16 %v399, %v397
  %v532 = vpack.c.b16 %v402, %v400
  %v533 = vpack.c.b16 %v403, %v401
  %v534 = vpack.c.b16 %v406, %v404
  %v535 = vpack.c.b16 %v407, %v405
  %v536 = vpack.c.b16 %v410, %v408
  %v537 = vpack.c.b16 %v411, %v409
  %v538 = vpack.c.b16 %v414, %v412
  %v539 = vpack.c.b16 %v415, %v413
  %v540 = vpack.c.b16 %v418, %v416
  %v541 = vpack.c.b16 %v419, %v417
  %v542 = vpack.c.b16 %v422, %v420
  %v543 = vpack.c.b16 %v423, %v421
  %v544 = vpack.c.b16 %v426, %v424
  %v545 = vpack.c.b16 %v427, %v425
  %v546 = vpack.c.b16 %v430, %v428
  %v547 = vpack.c.b16 %v431, %v429
  %v548 = vpack.c.b16 %v434, %v432
  %v549 = vpack.c.b16 %v435, %v433
  %v550 = vpack.c.b16 %v438, %v436
  %v551 = vpack.c.b16 %v439, %v437
  %v552 = vpack.c.b16 %v442, %v440
  %v553 = vpack.c.b16 %v443, %v441
  %v554 = vpack.c.b16 %v446, %v444
  %v555 = vpack.c.b16 %v447, %v445
  %v556 = vpack.c.b16 %v450, %v448
  %v557 = vpack.c.b16 %v451, %v449
  %v558 = vpack.c.b16 %v454, %v452
  %v559 = vpack.c.b16 %v455, %v453
  %v560 = vpack.c.b16 %v458, %v456
  %v561 = vpack.c.b16 %v459, %v457
  %v562 = vpack.c.b16 %v462, %v460
  %v563 = vpack.c.b16 %v463, %v461
  %v564 = vpack.c.b16 %v466, %v464
  %v565 = vpack.c.b16 %v467, %v465
  %vm664 = vcmask 130048
  %v666 = vsel %vm664, %v167, 0
  %668 = vmatprep.subr.bf16.mxu0 %v469
  %669 = vmatpush1.bf16.msra.mxu0 %v468
  %670 = vmatprep.subr.bf16.mxu0 %v471
  %671 = vmatpush1.bf16.msra.mxu0 %v470
  %672 = vmatprep.subr.bf16.mxu0 %v473
  %673 = vmatpush1.bf16.msra.mxu0 %v472
  %674 = vmatprep.subr.bf16.mxu0 %v475
  %675 = vmatpush1.bf16.msra.mxu0 %v474
  %676 = vmatprep.subr.bf16.mxu0 %v477
  %677 = vmatpush1.bf16.msra.mxu0 %v476
  %678 = vmatprep.subr.bf16.mxu0 %v479
  %679 = vmatpush1.bf16.msra.mxu0 %v478
  %680 = vmatprep.subr.bf16.mxu0 %v481
  %681 = vmatpush1.bf16.msra.mxu0 %v480
  %682 = vmatprep.subr.bf16.mxu0 %v483
  %683 = vmatpush1.bf16.msra.mxu0 %v482
  %684 = vmatprep.subr.bf16.mxu0 %v485
  %685 = vmatpush1.bf16.msra.mxu0 %v484
  %686 = vmatprep.subr.bf16.mxu0 %v487
  %687 = vmatpush1.bf16.msra.mxu0 %v486
  %688 = vmatprep.subr.bf16.mxu0 %v489
  %689 = vmatpush1.bf16.msra.mxu0 %v488
  %690 = vmatprep.subr.bf16.mxu0 %v491
  %691 = vmatpush1.bf16.msra.mxu0 %v490
  %692 = vmatprep.subr.bf16.mxu0 %v493
  %693 = vmatpush1.bf16.msra.mxu0 %v492
  %694 = vmatprep.subr.bf16.mxu0 %v495
  %695 = vmatpush1.bf16.msra.mxu0 %v494
  %696 = vmatprep.subr.bf16.mxu0 %v497
  %697 = vmatpush1.bf16.msra.mxu0 %v496
  %698 = vmatprep.subr.bf16.mxu0 %v499
  %699 = vmatpush1.bf16.msra.mxu0 %v498
  %700 = vmatprep.mubr.bf16.mxu0 %v162
  %701 = vmatmul.mubr.bf16.gmra.mrb[0].mxu0 %v161
  %v702 = vpop.f32.mrb[0].mxu0
  %v703 = vadd.f32 %v132, %v702
  %v704 = vpop.f32.mrb[0].mxu0
  %v705 = vadd.f32 %v136, %v704
  %v706 = vpop.f32.mrb[0].mxu0
  %v707 = vadd.f32 %v132, %v706
  %v708 = vpop.f32.mrb[0].mxu0
  %v709 = vadd.f32 %v136, %v708
  %710 = vdwg.mxu0
  %711 = vmatprep.subr.bf16.mxu0 %v501
  %712 = vmatpush1.bf16.msra.mxu0 %v500
  %713 = vmatprep.subr.bf16.mxu0 %v503
  %714 = vmatpush1.bf16.msra.mxu0 %v502
  %715 = vmatprep.subr.bf16.mxu0 %v505
  %716 = vmatpush1.bf16.msra.mxu0 %v504
  %717 = vmatprep.subr.bf16.mxu0 %v507
  %718 = vmatpush1.bf16.msra.mxu0 %v506
  %719 = vmatprep.subr.bf16.mxu0 %v509
  %720 = vmatpush1.bf16.msra.mxu0 %v508
  %721 = vmatprep.subr.bf16.mxu0 %v511
  %722 = vmatpush1.bf16.msra.mxu0 %v510
  %723 = vmatprep.subr.bf16.mxu0 %v513
  %724 = vmatpush1.bf16.msra.mxu0 %v512
  %725 = vmatprep.subr.bf16.mxu0 %v515
  %726 = vmatpush1.bf16.msra.mxu0 %v514
  %727 = vmatprep.subr.bf16.mxu0 %v517
  %728 = vmatpush1.bf16.msra.mxu0 %v516
  %729 = vmatprep.subr.bf16.mxu0 %v519
  %730 = vmatpush1.bf16.msra.mxu0 %v518
  %731 = vmatprep.subr.bf16.mxu0 %v521
  %732 = vmatpush1.bf16.msra.mxu0 %v520
  %733 = vmatprep.subr.bf16.mxu0 %v523
  %734 = vmatpush1.bf16.msra.mxu0 %v522
  %735 = vmatprep.subr.bf16.mxu0 %v525
  %736 = vmatpush1.bf16.msra.mxu0 %v524
  %737 = vmatprep.subr.bf16.mxu0 %v527
  %738 = vmatpush1.bf16.msra.mxu0 %v526
  %739 = vmatprep.subr.bf16.mxu0 %v529
  %740 = vmatpush1.bf16.msra.mxu0 %v528
  %741 = vmatprep.subr.bf16.mxu0 %v531
  %742 = vmatpush1.bf16.msra.mxu0 %v530
  %743 = vmatprep.mubr.bf16.mxu0 %v164
  %744 = vmatmul.mubr.bf16.gmra.mrb[0].mxu0 %v163
  %v745 = vpop.f32.mrb[0].mxu0
  %v746 = vadd.f32 %v703, %v745
  %v747 = vpop.f32.mrb[0].mxu0
  %v748 = vadd.f32 %v705, %v747
  %v749 = vpop.f32.mrb[0].mxu0
  %v750 = vadd.f32 %v707, %v749
  %v751 = vpop.f32.mrb[0].mxu0
  %v752 = vadd.f32 %v709, %v751
  %753 = vdwg.mxu0
  %754 = vmatprep.subr.bf16.mxu0 %v533
  %755 = vmatpush1.bf16.msra.mxu0 %v532
  %756 = vmatprep.subr.bf16.mxu0 %v535
  %757 = vmatpush1.bf16.msra.mxu0 %v534
  %758 = vmatprep.subr.bf16.mxu0 %v537
  %759 = vmatpush1.bf16.msra.mxu0 %v536
  %760 = vmatprep.subr.bf16.mxu0 %v539
  %761 = vmatpush1.bf16.msra.mxu0 %v538
  %762 = vmatprep.subr.bf16.mxu0 %v541
  %763 = vmatpush1.bf16.msra.mxu0 %v540
  %764 = vmatprep.subr.bf16.mxu0 %v543
  %765 = vmatpush1.bf16.msra.mxu0 %v542
  %766 = vmatprep.subr.bf16.mxu0 %v545
  %767 = vmatpush1.bf16.msra.mxu0 %v544
  %768 = vmatprep.subr.bf16.mxu0 %v547
  %769 = vmatpush1.bf16.msra.mxu0 %v546
  %770 = vmatprep.subr.bf16.mxu0 %v549
  %771 = vmatpush1.bf16.msra.mxu0 %v548
  %772 = vmatprep.subr.bf16.mxu0 %v551
  %773 = vmatpush1.bf16.msra.mxu0 %v550
  %774 = vmatprep.subr.bf16.mxu0 %v553
  %775 = vmatpush1.bf16.msra.mxu0 %v552
  %776 = vmatprep.subr.bf16.mxu0 %v555
  %777 = vmatpush1.bf16.msra.mxu0 %v554
  %778 = vmatprep.subr.bf16.mxu0 %v557
  %779 = vmatpush1.bf16.msra.mxu0 %v556
  %780 = vmatprep.subr.bf16.mxu0 %v559
  %781 = vmatpush1.bf16.msra.mxu0 %v558
  %782 = vmatprep.subr.bf16.mxu0 %v561
  %783 = vmatpush1.bf16.msra.mxu0 %v560
  %784 = vmatprep.subr.bf16.mxu0 %v563
  %785 = vmatpush1.bf16.msra.mxu0 %v562
  %786 = vmatprep.mubr.bf16.mxu0 %v166
  %787 = vmatmul.mubr.bf16.gmra.mrb[0].mxu0 %v165
  %v788 = vpop.f32.mrb[0].mxu0
  %v789 = vadd.f32 %v746, %v788
  %v790 = vpop.f32.mrb[0].mxu0
  %v791 = vadd.f32 %v748, %v790
  %v792 = vpop.f32.mrb[0].mxu0
  %v793 = vadd.f32 %v750, %v792
  %v794 = vpop.f32.mrb[0].mxu0
  %v795 = vadd.f32 %v752, %v794
  %796 = vdwg.mxu0
  %797 = vmatprep.subr.bf16.mxu0 %v565
  %798 = vmatpush1.bf16.msra.mxu0 %v564
  %799 = vmatprep.subr.bf16.mxu0 0
  %800 = vmatpush1.bf16.msra.mxu0 0
  %801 = vmatprep.subr.bf16.mxu0 0
  %802 = vmatpush1.bf16.msra.mxu0 0
  %803 = vmatprep.subr.bf16.mxu0 0
  %804 = vmatpush1.bf16.msra.mxu0 0
  %805 = vmatprep.subr.bf16.mxu0 0
  %806 = vmatpush1.bf16.msra.mxu0 0
  %807 = vmatprep.subr.bf16.mxu0 0
  %808 = vmatpush1.bf16.msra.mxu0 0
  %809 = vmatprep.subr.bf16.mxu0 0
  %810 = vmatpush1.bf16.msra.mxu0 0
  %811 = vmatprep.subr.bf16.mxu0 0
  %812 = vmatpush1.bf16.msra.mxu0 0
  %813 = vmatprep.subr.bf16.mxu0 0
  %814 = vmatpush1.bf16.msra.mxu0 0
  %815 = vmatprep.subr.bf16.mxu0 0
  %816 = vmatpush1.bf16.msra.mxu0 0
  %817 = vmatprep.subr.bf16.mxu0 0
  %818 = vmatpush1.bf16.msra.mxu0 0
  %819 = vmatprep.subr.bf16.mxu0 0
  %820 = vmatpush1.bf16.msra.mxu0 0
  %821 = vmatprep.subr.bf16.mxu0 0
  %822 = vmatpush1.bf16.msra.mxu0 0
  %823 = vmatprep.subr.bf16.mxu0 0
  %824 = vmatpush1.bf16.msra.mxu0 0
  %825 = vmatprep.subr.bf16.mxu0 0
  %826 = vmatpush1.bf16.msra.mxu0 0
  %827 = vmatprep.subr.bf16.mxu0 0
  %828 = vmatpush1.bf16.msra.mxu0 0
  %829 = vmatprep.mubr.bf16.mxu0 0
  %830 = vmatmul.mubr.bf16.gmra.mrb[0].mxu0 %v666
  %v831 = vpop.f32.mrb[0].mxu0
  %v832 = vadd.f32 %v789, %v831
  %v833 = vpop.f32.mrb[0].mxu0
  %v834 = vadd.f32 %v791, %v833
  %v835 = vpop.f32.mrb[0].mxu0
  %v836 = vadd.f32 %v793, %v835
  %v837 = vpop.f32.mrb[0].mxu0
  %v838 = vadd.f32 %v795, %v837
  %839 = vdwg.mxu0
  %v840 = vmax.f32 %v832, 0.0
  %v841 = vmax.f32 %v834, 0.0
  %v842 = vmax.f32 %v836, 0.0
  %v843 = vmax.f32 %v838, 0.0
  %v844 = vpack.c.bf16 %v842, %v840
  %v845 = vpack.c.bf16 %v843, %v841
  %v846 = vld [vmem:[%s3] sm:$0xff]
  %v847 = vld [vmem:[%s3 + $0x8] sm:$0xff]
  %v848 = vld [vmem:[%s3 + $0x10] sm:$0xff]
  %v849 = vld [vmem:[%s3 + $0x18] sm:$0xff]
  %v850 = vld [vmem:[%s3 + $0x20] sm:$0xff]
  %v851 = vld [vmem:[%s3 + $0x28] sm:$0xff]
  %v852 = vld [vmem:[%s3 + $0x30] sm:$0xff]
  %v853 = vld [vmem:[%s3 + $0x38] sm:$0xff]
  %v854 = vld [vmem:[%s3 + $0x40] sm:$0xff]
  %v855 = vld [vmem:[%s3 + $0x48] sm:$0xff]
  %v856 = vld [vmem:[%s3 + $0x50] sm:$0xff]
  %v857 = vld [vmem:[%s3 + $0x58] sm:$0xff]
  %v858 = vld [vmem:[%s3 + $0x60] sm:$0xff]
  %v859 = vld [vmem:[%s3 + $0x68] sm:$0xff]
  %v860 = vld [vmem:[%s3 + $0x70] sm:$0xff]
  %v861 = vld [vmem:[%s3 + $0x78] sm:$0xff]
  %v862 = vld [vmem:[%s3 + $0x80] sm:$0xff]
  %v863 = vld [vmem:[%s3 + $0x88] sm:$0xff]
  %v864 = vld [vmem:[%s3 + $0x90] sm:$0xff]
  %v865 = vld [vmem:[%s3 + $0x98] sm:$0xff]
  %v866 = vld [vmem:[%s3 + $0xa0] sm:$0xff]
  %v867 = vld [vmem:[%s3 + $0xa8] sm:$0xff]
  %v868 = vld [vmem:[%s3 + $0xb0] sm:$0xff]
  %v869 = vld [vmem:[%s3 + $0xb8] sm:$0xff]
  %v870 = vld [vmem:[%s3 + $0xc0] sm:$0xff]
  %v871 = vld [vmem:[%s3 + $0xc8] sm:$0xff]
  %v872 = vld [vmem:[%s3 + $0xd0] sm:$0xff]
  %v873 = vld [vmem:[%s3 + $0xd8] sm:$0xff]
  %v874 = vld [vmem:[%s3 + $0xe0] sm:$0xff]
  %v875 = vld [vmem:[%s3 + $0xe8] sm:$0xff]
  %v876 = vld [vmem:[%s3 + $0xf0] sm:$0xff]
  %v877 = vld [vmem:[%s3 + $0xf8] sm:$0xff]
  %v878 = vld [vmem:[%s4] sm:$0x3]
  %v880 = vlaneseq
  %v881 = vshrl.u32 %v880, 7
  %v882 = vsub.s32 0, %v881
  %v883 = vrot.slane %v878, %v882
  %v884 = vlaneseq
  %v885 = vshrl.u32 %v884, 7
  %v886 = vsub.s32 1, %v885
  %v887 = vrot.slane %v878, %v886
  %v922 = vunpack.c.l.b16 %v846
  %v923 = vunpack.c.h.b16 %v846
  %v924 = vunpack.c.l.b16 %v847
  %v925 = vunpack.c.h.b16 %v847
  %v926 = vunpack.c.l.b16 %v848
  %v927 = vunpack.c.h.b16 %v848
  %v928 = vunpack.c.l.b16 %v849
  %v929 = vunpack.c.h.b16 %v849
  %v930 = vunpack.c.l.b16 %v850
  %v931 = vunpack.c.h.b16 %v850
  %v932 = vunpack.c.l.b16 %v851
  %v933 = vunpack.c.h.b16 %v851
  %v934 = vunpack.c.l.b16 %v852
  %v935 = vunpack.c.h.b16 %v852
  %v936 = vunpack.c.l.b16 %v853
  %v937 = vunpack.c.h.b16 %v853
  %v938 = vunpack.c.l.b16 %v854
  %v939 = vunpack.c.h.b16 %v854
  %v940 = vunpack.c.l.b16 %v855
  %v941 = vunpack.c.h.b16 %v855
  %v942 = vunpack.c.l.b16 %v856
  %v943 = vunpack.c.h.b16 %v856
  %v944 = vunpack.c.l.b16 %v857
  %v945 = vunpack.c.h.b16 %v857
  %v946 = vunpack.c.l.b16 %v858
  %v947 = vunpack.c.h.b16 %v858
  %v948 = vunpack.c.l.b16 %v859
  %v949 = vunpack.c.h.b16 %v859
  %v950 = vunpack.c.l.b16 %v860
  %v951 = vunpack.c.h.b16 %v860
  %v952 = vunpack.c.l.b16 %v861
  %v953 = vunpack.c.h.b16 %v861
  %v954 = vunpack.c.l.b16 %v862
  %v955 = vunpack.c.h.b16 %v862
  %v956 = vunpack.c.l.b16 %v863
  %v957 = vunpack.c.h.b16 %v863
  %v958 = vunpack.c.l.b16 %v864
  %v959 = vunpack.c.h.b16 %v864
  %v960 = vunpack.c.l.b16 %v865
  %v961 = vunpack.c.h.b16 %v865
  %v962 = vunpack.c.l.b16 %v866
  %v963 = vunpack.c.h.b16 %v866
  %v964 = vunpack.c.l.b16 %v867
  %v965 = vunpack.c.h.b16 %v867
  %v966 = vunpack.c.l.b16 %v868
  %v967 = vunpack.c.h.b16 %v868
  %v968 = vunpack.c.l.b16 %v869
  %v969 = vunpack.c.h.b16 %v869
  %v970 = vunpack.c.l.b16 %v870
  %v971 = vunpack.c.h.b16 %v870
  %v972 = vunpack.c.l.b16 %v871
  %v973 = vunpack.c.h.b16 %v871
  %v974 = vunpack.c.l.b16 %v872
  %v975 = vunpack.c.h.b16 %v872
  %v976 = vunpack.c.l.b16 %v873
  %v977 = vunpack.c.h.b16 %v873
  %v978 = vunpack.c.l.b16 %v874
  %v979 = vunpack.c.h.b16 %v874
  %v980 = vunpack.c.l.b16 %v875
  %v981 = vunpack.c.h.b16 %v875
  %v982 = vunpack.c.l.b16 %v876
  %v983 = vunpack.c.h.b16 %v876
  %v984 = vunpack.c.l.b16 %v877
  %v985 = vunpack.c.h.b16 %v877
  %v986 = vpack.c.b16 %v924, %v922
  %v987 = vpack.c.b16 %v925, %v923
  %v988 = vpack.c.b16 %v928, %v926
  %v989 = vpack.c.b16 %v929, %v927
  %v990 = vpack.c.b16 %v932, %v930
  %v991 = vpack.c.b16 %v933, %v931
  %v992 = vpack.c.b16 %v936, %v934
  %v993 = vpack.c.b16 %v937, %v935
  %v994 = vpack.c.b16 %v940, %v938
  %v995 = vpack.c.b16 %v941, %v939
  %v996 = vpack.c.b16 %v944, %v942
  %v997 = vpack.c.b16 %v945, %v943
  %v998 = vpack.c.b16 %v948, %v946
  %v999 = vpack.c.b16 %v949, %v947
  %v1000 = vpack.c.b16 %v952, %v950
  %v1001 = vpack.c.b16 %v953, %v951
  %v1002 = vpack.c.b16 %v956, %v954
  %v1003 = vpack.c.b16 %v957, %v955
  %v1004 = vpack.c.b16 %v960, %v958
  %v1005 = vpack.c.b16 %v961, %v959
  %v1006 = vpack.c.b16 %v964, %v962
  %v1007 = vpack.c.b16 %v965, %v963
  %v1008 = vpack.c.b16 %v968, %v966
  %v1009 = vpack.c.b16 %v969, %v967
  %v1010 = vpack.c.b16 %v972, %v970
  %v1011 = vpack.c.b16 %v973, %v971
  %v1012 = vpack.c.b16 %v976, %v974
  %v1013 = vpack.c.b16 %v977, %v975
  %v1014 = vpack.c.b16 %v980, %v978
  %v1015 = vpack.c.b16 %v981, %v979
  %v1016 = vpack.c.b16 %v984, %v982
  %v1017 = vpack.c.b16 %v985, %v983
  %1050 = vmatprep.subr.bf16.mxu0 %v987
  %1051 = vmatpush1.bf16.msra.mxu0 %v986
  %1052 = vmatprep.subr.bf16.mxu0 %v989
  %1053 = vmatpush1.bf16.msra.mxu0 %v988
  %1054 = vmatprep.subr.bf16.mxu0 %v991
  %1055 = vmatpush1.bf16.msra.mxu0 %v990
  %1056 = vmatprep.subr.bf16.mxu0 %v993
  %1057 = vmatpush1.bf16.msra.mxu0 %v992
  %1058 = vmatprep.subr.bf16.mxu0 %v995
  %1059 = vmatpush1.bf16.msra.mxu0 %v994
  %1060 = vmatprep.subr.bf16.mxu0 %v997
  %1061 = vmatpush1.bf16.msra.mxu0 %v996
  %1062 = vmatprep.subr.bf16.mxu0 %v999
  %1063 = vmatpush1.bf16.msra.mxu0 %v998
  %1064 = vmatprep.subr.bf16.mxu0 %v1001
  %1065 = vmatpush1.bf16.msra.mxu0 %v1000
  %1066 = vmatprep.subr.bf16.mxu0 %v1003
  %1067 = vmatpush1.bf16.msra.mxu0 %v1002
  %1068 = vmatprep.subr.bf16.mxu0 %v1005
  %1069 = vmatpush1.bf16.msra.mxu0 %v1004
  %1070 = vmatprep.subr.bf16.mxu0 %v1007
  %1071 = vmatpush1.bf16.msra.mxu0 %v1006
  %1072 = vmatprep.subr.bf16.mxu0 %v1009
  %1073 = vmatpush1.bf16.msra.mxu0 %v1008
  %1074 = vmatprep.subr.bf16.mxu0 %v1011
  %1075 = vmatpush1.bf16.msra.mxu0 %v1010
  %1076 = vmatprep.subr.bf16.mxu0 %v1013
  %1077 = vmatpush1.bf16.msra.mxu0 %v1012
  %1078 = vmatprep.subr.bf16.mxu0 %v1015
  %1079 = vmatpush1.bf16.msra.mxu0 %v1014
  %1080 = vmatprep.subr.bf16.mxu0 %v1017
  %1081 = vmatpush1.bf16.msra.mxu0 %v1016
  %1082 = vmatprep.mubr.bf16.mxu0 %v845
  %1083 = vmatmul.mubr.bf16.gmra.mrb[0].mxu0 %v844
  %v1084 = vpop.f32.mrb[0].mxu0
  %v1085 = vadd.f32 %v883, %v1084
  %v1086 = vpop.f32.mrb[0].mxu0
  %v1087 = vadd.f32 %v887, %v1086
  %v1088 = vpop.f32.mrb[0].mxu0
  %v1089 = vadd.f32 %v883, %v1088
  %v1090 = vpop.f32.mrb[0].mxu0
  %v1091 = vadd.f32 %v887, %v1090
  %1092 = vdwg.mxu0
  %v1093 = vmax.f32 %v1085, 0.0
  %v1094 = vmax.f32 %v1087, 0.0
  %v1095 = vmax.f32 %v1089, 0.0
  %v1096 = vmax.f32 %v1091, 0.0
  %v1097 = vlaneseq
  %v1098 = vand.u32 %v1097, 127
  %v1099 = vadd.s32 %v1098, 128
  %v1100 = vmax.f32 %v1093, %v1094
  %1101 = vmax.xlane.f32.xlu0 %v1100
  %v1102 = vpop.xlane.xlu0 %1101
  %v1103 = vmax.f32 %v1095, %v1096
  %1104 = vmax.xlane.f32.xlu0 %v1103
  %v1105 = vpop.xlane.xlu0 %1104
  %vm1106 = vcmp.lt.s32.totalorder %v1098, 200
  %vm1107 = vcmp.lt.s32.totalorder %v1099, 200
  %v1108 = vsub.f32 %v1093, %v1102
  %v1109 = vsub.f32 %v1094, %v1102
  %v1110 = vsub.f32 %v1095, %v1105
  %v1111 = vsub.f32 %v1096, %v1105
  %v1112 = vmul.f32 %v1108, 1.442695
  %v1113 = vpow.pop %v1112
  %v1114 = vmul.f32 %v1109, 1.442695
  %v1115 = vpow.pop %v1114
  %v1116 = vmul.f32 %v1110, 1.442695
  %v1117 = vpow.pop %v1116
  %v1118 = vmul.f32 %v1111, 1.442695
  %v1119 = vpow.pop %v1118
  %v1120 = vsel %vm1106, 1, 0
  %v1121 = vsel %vm1107, 1, 0
  %vm1122 = vcmp.eq.s32.totalorder %v1120, 1
  %vm1123 = vcmp.eq.s32.totalorder %v1121, 1
  %v1124 = vsel %vm1122, %v1113, 0.0
  %v1125 = vsel %vm1123, %v1115, 0.0
  %v1126 = vsel %vm1122, %v1117, 0.0
  %v1127 = vsel %vm1123, %v1119, 0.0
  %v1128 = vadd.f32 %v1124, %v1125
  %1129 = vadd.xlane.f32.xlu0 %v1128
  %v1130 = vpop.xlane.xlu0 %1129
  %v1131 = vadd.f32 %v1126, %v1127
  %1132 = vadd.xlane.f32.xlu0 %v1131
  %v1133 = vpop.xlane.xlu0 %1132
  %v1134 = vrcp.pop %v1130
  %v1135 = vmul.f32 %v1124, %v1134
  %v1136 = vmul.f32 %v1125, %v1134
  %v1137 = vrcp.pop %v1133
  %v1138 = vmul.f32 %v1126, %v1137
  %v1139 = vmul.f32 %v1127, %v1137
  %1140 = vst [vmem:[%s5] sm:$0xff] %v1135
  %1141 = vst [vmem:[%s5 + $0x8] sm:$0xff] %v1136
  %1142 = vst [vmem:[%s5 + $0x10] sm:$0xff] %v1138
  %1143 = vst [vmem:[%s5 + $0x18] sm:$0xff] %v1139
  // Predicated region
  $region22: #{mlp_mnist_forward.1} parent=0 // pred_check
    _
  $region23: #{mlp_mnist_forward.1} parent=0 // pred_check_branch
    %1145 = sbr.rel (0) target = $region25
  $region24: #{mlp_mnist_forward.1} parent=0 // pred_region
    _
  $region25: #{mlp_mnist_forward.1} parent=0 // pred_fallthru
    _
  // Predicated region
  $region26: #{mlp_mnist_forward.1} parent=0 // pred_check
    _
  $region27: #{mlp_mnist_forward.1} parent=0 // pred_check_branch
    %1147 = sbr.rel (0) target = $region29
  $region28: #{mlp_mnist_forward.1} parent=0 // pred_region
    _
  $region29: #{mlp_mnist_forward.1} parent=0 // pred_fallthru
    _

</llo_original>
